<compile_context>
chip_gen: v5e
topology: v5e:2x2
jax: 0.10.0
libtpu: 0.0.40
codegen_flags: <defaults>
</compile_context>

<pallas_src>
import functools
import math

import jax
import jax.numpy as jnp
from jax.experimental import pallas as pl
from jax.experimental.pallas import tpu as pltpu

LANE = 128
_LOG2 = math.log(2.0)
_EPS = 1e-12


def _logcosh_vals(x_f32, t_f32):
    # Numerically stable log(cosh(t - x + eps)):
    #   log(cosh(a)) = |a| + log(1 + exp(-2|a|)) - log(2), exp arg in (0, 1].
    a = jnp.abs(t_f32 - x_f32 + _EPS)
    return a + jnp.log(1.0 + jnp.exp(-2.0 * a)) - _LOG2


def _logcosh_kernel(x_ref, t_ref, o_ref, *, tm, rows, needs_mask):
    # grid = (p, steps): axis 0 = per-core chunk of row-blocks ("parallel"),
    # axis 1 = reduction over tiles within the chunk ("arbitrary").
    i = pl.program_id(1)
    steps = pl.num_programs(1)

    # o_ref's block index only depends on the parallel axis, so this (1, LANE)
    # tile is VMEM-resident across the reduction axis: accumulate directly.
    @pl.when(i == 0)
    def _():
        o_ref[...] = jnp.zeros_like(o_ref)

    # Stream native dtype; cast in-kernel.
    x = x_ref[...].astype(jnp.float32)
    t = t_ref[...].astype(jnp.float32)
    val = _logcosh_vals(x, t)

    if needs_mask:
        # Cheap row-level bound check. Covers both the partial last block and
        # the clamped duplicate block when the block count is odd (its rows
        # all fall >= `rows`, so it contributes zero — no double counting).
        # Garbage rows may hold inf/NaN; jnp.where (select) discards them.
        blk = pl.program_id(0) * steps + i
        r = jax.lax.broadcasted_iota(jnp.int32, (tm, 1), 0)
        val = jnp.where(blk * tm + r < rows, val, 0.0)

    o_ref[...] += jnp.sum(val, axis=0, keepdims=True)


def log_cosh_loss(x, target, *, tile_rows=None):
    assert x.shape == target.shape, "x and target must have the same shape"
    n = x.size
    assert n > 0

    xf = x.reshape(-1)
    tf = target.reshape(-1)

    # Ragged (< LANE) lane tail: fold in with plain jnp on <=127 elements
    # instead of jnp.pad (which would copy both full inputs through HBM).
    n_aligned = n - (n % LANE)
    tail_sum = jnp.float32(0.0)
    if n_aligned != n:
        tail_sum = jnp.sum(
            _logcosh_vals(
                xf[n_aligned:].astype(jnp.float32),
                tf[n_aligned:].astype(jnp.float32),
            )
        )

    if n_aligned == 0:
        # Fewer than 128 elements total: tail expression covers everything.
        return tail_sum / n

    rows = n_aligned // LANE
    x2d = xf[:n_aligned].reshape(rows, LANE)
    t2d = tf[:n_aligned].reshape(rows, LANE)

    # ~1 MiB per input per buffer: 2048 rows for f32, 4096 for bf16.
    if tile_rows is None:
        itemsize = jnp.dtype(x.dtype).itemsize
        tile_rows = max(8, (1 << 20) // (LANE * max(itemsize, 1)))
    tm = tile_rows if rows >= tile_rows else rows
    total_blocks = pl.cdiv(rows, tm)

    # Always use both TensorCores (v7x) whenever there are >= 2 blocks; odd
    # block counts are handled via index clamping + in-kernel masking instead
    # of serializing the whole stream on one core.
    p = 2 if total_blocks >= 2 else 1
    steps = pl.cdiv(total_blocks, p)
    last = total_blocks - 1

    needs_mask = (p * steps * tm) != rows

    def in_map(j, i):
        return (jnp.minimum(j * steps + i, last), 0)

    kernel = functools.partial(
        _logcosh_kernel, tm=tm, rows=rows, needs_mask=needs_mask
    )

    partials = pl.pallas_call(
        kernel,
        # Lane-dense per-core partial sums; final reduce + 1/N in the wrapper.
        out_shape=jax.ShapeDtypeStruct((p, 1, LANE), jnp.float32),
        grid_spec=pltpu.PrefetchScalarGridSpec(
            num_scalar_prefetch=0,
            grid=(p, steps),
            in_specs=[
                pl.BlockSpec((tm, LANE), in_map),
                pl.BlockSpec((tm, LANE), in_map),
            ],
            out_specs=pl.BlockSpec((None, 1, LANE), lambda j, i: (j, 0, 0)),
        ),
        compiler_params=pltpu.CompilerParams(
            dimension_semantics=("parallel", "arbitrary"),
            vmem_limit_bytes=32 * 1024 * 1024,
        ),
    )(x2d, t2d)

    return (jnp.sum(partials) + tail_sum) * (1.0 / n)


def _ref_loss(x, target):
    return jnp.mean(jnp.log(jnp.cosh(target - x + 1e-12)))


if __name__ == "__main__":
    key = jax.random.PRNGKey(0)
    k1, k2, k3, k4 = jax.random.split(key, 4)

    # Primary check: small NCHW-like regression shapes (aligned, single block).
    x = jax.random.normal(k1, (2, 4, 16, 16), dtype=jnp.float32)
    target = jax.random.normal(k2, (2, 4, 16, 16), dtype=jnp.float32)
    loss = log_cosh_loss(x, target)
    jax.block_until_ready(loss)
    ref = _ref_loss(x, target)
    assert jnp.allclose(loss, ref, rtol=1e-5, atol=1e-6), (loss, ref)

    # Secondary check: misaligned size + small tile to exercise the odd block
    # count (p=2 with index clamp), partial-block row mask, and the jnp tail.
    n2 = 22 * LANE + 13
    x2 = jax.random.normal(k3, (n2,), dtype=jnp.float32)
    t2 = jax.random.normal(k4, (n2,), dtype=jnp.float32)
    loss2 = log_cosh_loss(x2, t2, tile_rows=8)
    jax.block_until_ready(loss2)
    ref2 = _ref_loss(x2, t2)
    assert jnp.allclose(loss2, ref2, rtol=1e-5, atol=1e-6), (loss2, ref2)

    print("KERNEL_OK")
</pallas_src>

<mosaic_0001>
module attributes {stable_mosaic.version = 11 : i64} {
  func.func @_logcosh_kernel(%arg0: i32, %arg1: i32, %arg2: memref<16x128xf32, #tpu.memory_space<vmem>>, %arg3: memref<16x128xf32, #tpu.memory_space<vmem>>, %arg4: memref<1x1x128xf32, #tpu.memory_space<vmem>>) attributes {dimension_semantics = [#tpu.dimension_semantics<parallel>, #tpu.dimension_semantics<arbitrary>], iteration_bounds = array<i64: 1, 1>, scalar_prefetch = 0 : i64, scratch_operands = 0 : i64, tpu.core_type = #tpu.core_type<tc>, window_params = [{transform_indices = @transform_0, window_bounds = array<i64: 16, 128>}, {transform_indices = @transform_1, window_bounds = array<i64: 16, 128>}, {transform_indices = @transform_2, window_bounds = array<i64: 1, 1, 128>}]} {
    %c0_i32 = arith.constant 0 : i32
    %0 = arith.cmpi eq, %arg1, %c0_i32 : i32
    %1 = arith.extui %0 : i1 to i32
    %c0_i32_0 = arith.constant 0 : i32
    %2 = arith.cmpi ne, %1, %c0_i32_0 : i32
    scf.if %2 {
      %cst_14 = arith.constant 0.000000e+00 : f32
      %26 = vector.broadcast %cst_14 : f32 to vector<1x128xf32>
      %c0_15 = arith.constant 0 : index
      %c0_16 = arith.constant 0 : index
      %c0_17 = arith.constant 0 : index
      %27 = vector.load %arg4[%c0_15, %c0_16, %c0_17] : memref<1x1x128xf32, #tpu.memory_space<vmem>>, vector<1x1x128xf32>
      %28 = vector.shape_cast %27 : vector<1x1x128xf32> to vector<1x128xf32>
      %29 = vector.shape_cast %26 : vector<1x128xf32> to vector<1x1x128xf32>
      tpu.vector_store %arg4[%c0_15, %c0_16, %c0_17], %29 {strides = array<i32>} : memref<1x1x128xf32, #tpu.memory_space<vmem>>, vector<1x1x128xf32>,
    } else {
    }
    %c0 = arith.constant 0 : index
    %c0_1 = arith.constant 0 : index
    %3 = vector.load %arg2[%c0, %c0_1] : memref<16x128xf32, #tpu.memory_space<vmem>>, vector<16x128xf32>
    %c0_2 = arith.constant 0 : index
    %c0_3 = arith.constant 0 : index
    %4 = vector.load %arg3[%c0_2, %c0_3] : memref<16x128xf32, #tpu.memory_space<vmem>>, vector<16x128xf32>
    %5 = arith.subf %4, %3 : vector<16x128xf32>
    %cst = arith.constant 9.99999996E-13 : f32
    %6 = vector.broadcast %cst : f32 to vector<16x128xf32>
    %7 = arith.addf %5, %6 : vector<16x128xf32>
    %8 = math.absf %7 : vector<16x128xf32>
    %cst_4 = arith.constant -2.000000e+00 : f32
    %9 = vector.broadcast %cst_4 : f32 to vector<16x128xf32>
    %10 = arith.mulf %9, %8 : vector<16x128xf32>
    %11 = math.exp %10 : vector<16x128xf32>
    %cst_5 = arith.constant 1.000000e+00 : f32
    %12 = vector.broadcast %cst_5 : f32 to vector<16x128xf32>
    %13 = arith.addf %12, %11 : vector<16x128xf32>
    %14 = math.log %13 : vector<16x128xf32>
    %15 = arith.addf %8, %14 : vector<16x128xf32>
    %cst_6 = arith.constant 0.693147182 : f32
    %16 = vector.broadcast %cst_6 : f32 to vector<16x128xf32>
    %17 = arith.subf %15, %16 : vector<16x128xf32>
    %c0_7 = arith.constant 0 : index
    %c0_8 = arith.constant 0 : index
    %c0_9 = arith.constant 0 : index
    %18 = vector.load %arg4[%c0_7, %c0_8, %c0_9] : memref<1x1x128xf32, #tpu.memory_space<vmem>>, vector<1x1x128xf32>
    %19 = vector.shape_cast %18 : vector<1x1x128xf32> to vector<1x128xf32>
    %cst_10 = arith.constant dense<0.000000e+00> : vector<128xf32>
    %20 = vector.multi_reduction <add>, %17, %cst_10 [0] : vector<16x128xf32> to vector<128xf32>
    %21 = vector.shape_cast %20 : vector<128xf32> to vector<1x128xf32>
    %22 = arith.addf %19, %21 : vector<1x128xf32>
    %c0_11 = arith.constant 0 : index
    %c0_12 = arith.constant 0 : index
    %c0_13 = arith.constant 0 : index
    %23 = vector.load %arg4[%c0_11, %c0_12, %c0_13] : memref<1x1x128xf32, #tpu.memory_space<vmem>>, vector<1x1x128xf32>
    %24 = vector.shape_cast %23 : vector<1x1x128xf32> to vector<1x128xf32>
    %25 = vector.shape_cast %22 : vector<1x128xf32> to vector<1x1x128xf32>
    tpu.vector_store %arg4[%c0_11, %c0_12, %c0_13], %25 {strides = array<i32>} : memref<1x1x128xf32, #tpu.memory_space<vmem>>, vector<1x1x128xf32>,
    return
  }
  func.func @transform_0(%arg0: i32, %arg1: i32) -> (i32, i32) {
    %c1_i32 = arith.constant 1 : i32
    %0 = arith.muli %arg0, %c1_i32 : i32
    %1 = arith.addi %0, %arg1 : i32
    %c0_i32 = arith.constant 0 : i32
    %2 = arith.minsi %1, %c0_i32 : i32
    %c0_i32_0 = arith.constant 0 : i32
    %c0_i32_1 = arith.constant 0 : i32
    return %2, %c0_i32_0 : i32, i32
  }
  func.func @transform_1(%arg0: i32, %arg1: i32) -> (i32, i32) {
    %c1_i32 = arith.constant 1 : i32
    %0 = arith.muli %arg0, %c1_i32 : i32
    %1 = arith.addi %0, %arg1 : i32
    %c0_i32 = arith.constant 0 : i32
    %2 = arith.minsi %1, %c0_i32 : i32
    %c0_i32_0 = arith.constant 0 : i32
    %c0_i32_1 = arith.constant 0 : i32
    return %2, %c0_i32_0 : i32, i32
  }
  func.func @transform_2(%arg0: i32, %arg1: i32) -> (i32, i32, i32) {
    %c0_i32 = arith.constant 0 : i32
    %c0_i32_0 = arith.constant 0 : i32
    %c0_i32_1 = arith.constant 0 : i32
    return %arg0, %c0_i32, %c0_i32_0 : i32, i32, i32
  }
}

</mosaic_0001>

<llo_original>
// kernel: tpu_custom_call.1
$region0: #{tpu_custom_call.1}
  #allocation0 [shape = 'u32[]', space=smem, size = 0x4, offset = 0x4, fixed_abs, tag = 'smem constant byte address 0x4 - core index']
  #allocation1 [shape = 'u32[72,128]{1,0:T(1,128)}', space=vmem, size = 0x9000, scoped, tag = 'internal scratch']
  %s0 = inlined_call_operand.hbm [shape: f32[16,128], index: 0, kind: input, shape index: {}]
  %s1 = inlined_call_operand.hbm [shape: f32[16,128], index: 1, kind: input, shape index: {}]
  %s2 = inlined_call_operand.hbm [shape: f32[1,1,128], index: 2, kind: output, shape index: {}]
  %s3 = sld [smem:[#allocation0]]
  $region30: #{tpu_custom_call.1} parent=0
    _
  %s5 = ssub.s32 1, %s3
  %s6 = scalar_select 0, %s5, %s3
  $region1: #{tpu_custom_call.1} parent=0
    #allocation2 [shape = 'u8[8192]{0}', space=vmem, size = 0x2000, scoped, tag = 'input window, operand 0, single buffered']
    #allocation3 [shape = 's32[1]{0}', space=sflag, size = 0x4, scoped, tag = 'scoped memory for tpu_custom_call.1']
    #allocation4 [shape = 's32[1]{0}', space=sflag, size = 0x4, scoped, tag = 'scoped memory for tpu_custom_call.1']
    #allocation5 [shape = 'u8[8192]{0}', space=vmem, size = 0x2000, scoped, tag = 'input window, operand 1, single buffered']
    #allocation6 [shape = 's32[1]{0}', space=sflag, size = 0x4, scoped, tag = 'scoped memory for tpu_custom_call.1']
    #allocation7 [shape = 'u8[512]{0}', space=vmem, size = 0x400, scoped, tag = 'output window, operand 0, single buffered']
    %7 = vsyncpa [#allocation3], 0
    %8 = vsyncpa [#allocation6], 0
    %9 = vsyncpa [#allocation4], 0
    // Predicated region
    $region2: #{tpu_custom_call.1} parent=1 // pred_check
      _
    $region3: #{tpu_custom_call.1} parent=1 // pred_check_branch
      %11 = sbr.rel (0) target = $region5
    $region4: #{tpu_custom_call.1} parent=1 // pred_region
      %s12 = sadd.s32 0, 0
      %p13 = scmp.lt.s32.totalorder %s12, 0
      %s14 = scalar_select %p13, %s12, 0
      %s15 = smul.u32 2, %s14
      %17 = vsyncadd [#allocation3], 0
      %s18 = smul.addr %s15, 8
      %s19 = scalar_lea.hbm %s0, %s18
      %s20 = sshll.u32 %s19, 4
      %s21 = int_to_ptr.hbm [resolvable:$true] %s20
      %s22 = sshll.u32 [#allocation2], 4
      %s23 = int_to_ptr.vmem [resolvable:$true] %s22
      %28 = dma.hbm_to_vmem [thread:$0]  %s21, 256, %s23, [#allocation3], 128, 128, 8
    $region5: #{tpu_custom_call.1} parent=1 // pred_fallthru
      _
    // Predicated region
    $region6: #{tpu_custom_call.1} parent=1 // pred_check
      _
    $region7: #{tpu_custom_call.1} parent=1 // pred_check_branch
      %30 = sbr.rel (0) target = $region9
    $region8: #{tpu_custom_call.1} parent=1 // pred_region
      %s31 = sadd.s32 0, 0
      %p32 = scmp.lt.s32.totalorder %s31, 0
      %s33 = scalar_select %p32, %s31, 0
      %s34 = smul.u32 2, %s33
      %36 = vsyncadd [#allocation6], 0
      %s37 = smul.addr %s34, 8
      %s38 = scalar_lea.hbm %s1, %s37
      %s39 = sshll.u32 %s38, 4
      %s40 = int_to_ptr.hbm [resolvable:$true] %s39
      %s41 = sshll.u32 [#allocation5], 4
      %s42 = int_to_ptr.vmem [resolvable:$true] %s41
      %47 = dma.hbm_to_vmem [thread:$0]  %s40, 256, %s42, [#allocation6], 128, 128, 8
    $region9: #{tpu_custom_call.1} parent=1 // pred_fallthru
      _
    // Predicated region
    $region10: #{tpu_custom_call.1} parent=1 // pred_check
      _
    $region11: #{tpu_custom_call.1} parent=1 // pred_check_branch
      %49 = sbr.rel (0) target = $region13
    $region12: #{tpu_custom_call.1} parent=1 // pred_region
      %51 = dma.done [#allocation3], 256
    $region13: #{tpu_custom_call.1} parent=1 // pred_fallthru
      _
    // Predicated region
    $region14: #{tpu_custom_call.1} parent=1 // pred_check
      _
    $region15: #{tpu_custom_call.1} parent=1 // pred_check_branch
      %53 = sbr.rel (0) target = $region17
    $region16: #{tpu_custom_call.1} parent=1 // pred_region
      %55 = dma.done [#allocation6], 256
    $region17: #{tpu_custom_call.1} parent=1 // pred_fallthru
      _
    %s56 = sadd.s32 0, 0
    %p57 = scmp.lt.s32.totalorder %s56, 0
    %s58 = scalar_select %p57, %s56, 0
    %s59 = smul.u32 2, %s58
    %s60 = sadd.s32 0, 0
    %p61 = scmp.lt.s32.totalorder %s60, 0
    %s62 = scalar_select %p61, %s60, 0
    %s63 = smul.u32 2, %s62
    %p64 = scmp.eq.s32.totalorder 0, 0
    // Predicated region
    $region18: #{tpu_custom_call.1} parent=1 // pred_check
      %p65 = pneg %p64
    $region19: #{tpu_custom_call.1} parent=1 // pred_check_branch
      %67 = sbr.rel (%p65) target = $region21
    $region20: #{tpu_custom_call.1} parent=1 // pred_region
      %68 = vst [vmem:[#allocation7] sm:$0x1] 0.0
    $region21: #{tpu_custom_call.1} parent=1 // pred_fallthru
      _
    %v69 = vld [vmem:[#allocation2] sm:$0xff]
    %v70 = vld [vmem:[#allocation2 + $0x8] sm:$0xff]
    %v71 = vld [vmem:[#allocation5] sm:$0xff]
    %v72 = vld [vmem:[#allocation5 + $0x8] sm:$0xff]
    %v73 = vsub.f32 %v71, %v69
    %v74 = vsub.f32 %v72, %v70
    %v75 = vadd.f32 %v73, 1e-12
    %v76 = vadd.f32 %v74, 1e-12
    %v77 = vand.u32 2147483647, %v75
    %v78 = vand.u32 2147483647, %v76
    %v79 = vmul.f32 %v77, -2.0
    %v80 = vmul.f32 %v78, -2.0
    %v81 = vmul.f32 %v79, 1.442695
    %v82 = vpow.pop %v81
    %v83 = vmul.f32 %v80, 1.442695
    %v84 = vpow.pop %v83
    %v85 = vadd.f32 %v82, 1.0
    %v86 = vadd.f32 %v84, 1.0
    %v87 = vlog2.pop %v85
    %v88 = vmul.f32 %v87, 0.6931472
    %v89 = vlog2.pop %v86
    %v90 = vmul.f32 %v89, 0.6931472
    %v91 = vadd.f32 %v77, %v88
    %v92 = vadd.f32 %v78, %v90
    %v93 = vsub.f32 %v91, 0.6931472
    %v94 = vsub.f32 %v92, 0.6931472
    %v95 = vld [vmem:[#allocation7] sm:$0x1]
    %v96 = vadd.f32 %v93, %v94
    %v97 = vrot.slane %v96, 4
    %v98 = vadd.f32 %v96, %v97
    %v99 = vrot.slane %v98, 2
    %v100 = vadd.f32 %v98, %v99
    %v101 = vrot.slane %v100, 1
    %v102 = vadd.f32 %v100, %v101
    %v103 = vadd.f32 %v95, %v102
    %104 = vst [vmem:[#allocation7] sm:$0x1] %v103
    // Predicated region
    $region22: #{tpu_custom_call.1} parent=1 // pred_check
      _
    $region23: #{tpu_custom_call.1} parent=1 // pred_check_branch
      %106 = sbr.rel (0) target = $region25
    $region24: #{tpu_custom_call.1} parent=1 // pred_region
      %108 = vsyncadd [#allocation4], 0
      %s110 = sshll.u32 [#allocation7], 4
      %s111 = int_to_ptr.vmem [resolvable:$true] %s110
      %s112 = sshll.u32 %s2, 4
      %s113 = int_to_ptr.hbm [resolvable:$true] %s112
      %115 = dma.vmem_to_hbm [thread:$0]  %s111, 16, %s113, [#allocation4]
    $region25: #{tpu_custom_call.1} parent=1 // pred_fallthru
      _
    // Predicated region
    $region26: #{tpu_custom_call.1} parent=1 // pred_check
      _
    $region27: #{tpu_custom_call.1} parent=1 // pred_check_branch
      %117 = sbr.rel (0) target = $region29
    $region28: #{tpu_custom_call.1} parent=1 // pred_region
      %119 = dma.done [#allocation4], 16
    $region29: #{tpu_custom_call.1} parent=1 // pred_fallthru
      _
    %120 = vsyncpa [#allocation3], 1
    %121 = vsyncpa [#allocation6], 1
    %122 = vsyncpa [#allocation4], 1

</llo_original>
